<compile_context>
chip_gen: v5e
topology: v5e:2x2
jax: 0.10.0
libtpu: 0.0.40
codegen_flags: <defaults>
</compile_context>

<pallas_src>
import functools

import jax
import jax.numpy as jnp
from jax import lax
from jax.experimental import pallas as pl
from jax.experimental.pallas import tpu as pltpu


# ----------------------------------------------------------------------------
# Kernel 1: pairwise Euclidean distances of a point cloud (VR filtration input)
# ----------------------------------------------------------------------------
def _pdist_kernel_vpu(xi_ref, xj_ref, out_ref, *, d_orig):
    """Small-D path: per-coordinate (xi - xj)^2 accumulation on the VPU only."""
    xi = xi_ref[...]                       # (tm, Dp) row block, points on sublanes
    xj = xj_ref[...]                       # (tn, Dp) column block
    xjt = jnp.transpose(xj)                # (Dp, tn) single tiny in-kernel relayout
    tm, tn = xi.shape[0], xj.shape[0]
    d2 = jnp.zeros((tm, tn), jnp.float32)
    for d in range(d_orig):                # static unroll, D is tiny
        diff = xi[:, d:d + 1] - xjt[d:d + 1, :]          # (tm,1)-(1,tn) -> (tm,tn)
        d2 = d2 + diff * diff
    out_ref[...] = jnp.sqrt(d2)


def _pdist_kernel_mxu(xi_ref, xj_ref, out_ref):
    """Large-D path: Gram matrix on the MXU, transpose-free.

    (For large D on v6e, bf16 operands with preferred_element_type=f32 would
    run the MXU ~4x faster; kept f32 to preserve reference numerics.)
    """
    xi = xi_ref[...]                       # (tm, D)
    xj = xj_ref[...]                       # (tn, D)
    g = lax.dot_general(xi, xj, (((1,), (1,)), ((), ())),
                        preferred_element_type=jnp.float32)            # (tm, tn)
    sq_i = jnp.sum(xi * xi, axis=1, keepdims=True)                     # (tm, 1)
    ones = jnp.ones((1, xj.shape[1]), jnp.float32)
    sq_j = lax.dot_general(ones, xj * xj, (((1,), (1,)), ((), ())),
                           preferred_element_type=jnp.float32)         # (1, tn)
    d2 = jnp.maximum(sq_i + sq_j - 2.0 * g, 0.0)
    out_ref[...] = jnp.sqrt(d2)


def _pick_tile(n, candidates):
    for c in candidates:
        if n % c == 0:
            return c
    return n                               # fall back to the full dimension


def pairwise_dist(x):
    B, N, D = x.shape
    x = x.astype(jnp.float32)

    small_d = D <= 8
    if small_d and D < 8:
        # Pad coords to 8 (zeros contribute nothing) for a friendly
        # (tn, 8) -> (8, tn) in-kernel relayout.
        x_in = jnp.pad(x, ((0, 0), (0, 0), (0, 8 - D)))
    else:
        x_in = x
    Dp = x_in.shape[2]

    # Lane-dense output tiles; output tile <= 256*512*4 B = 512 KiB, so
    # double-buffered totals stay far below the 16/32 MiB scoped-VMEM defaults
    # (and v7x's 64 MiB physical VMEM).
    tm = _pick_tile(N, (256, 128, 64, 32, 16, 8))
    tn = _pick_tile(N, (512, 256, 128))

    kern = (functools.partial(_pdist_kernel_vpu, d_orig=D) if small_d
            else _pdist_kernel_mxu)

    # TODO(synk): on v5e, if DMA shows as exposed, bump pipeline depth with
    # pipeline_mode=pl.Buffered(3) on these specs.
    return pl.pallas_call(
        kern,
        out_shape=jax.ShapeDtypeStruct((B, N, N), jnp.float32),
        grid_spec=pltpu.PrefetchScalarGridSpec(
            num_scalar_prefetch=0,
            grid=(B, N // tm, N // tn),
            in_specs=[
                pl.BlockSpec((None, tm, Dp), lambda b, i, j: (b, i, 0)),
                pl.BlockSpec((None, tn, Dp), lambda b, i, j: (b, j, 0)),
            ],
            out_specs=pl.BlockSpec((None, tm, tn), lambda b, i, j: (b, i, j)),
        ),
        compiler_params=pltpu.CompilerParams(
            dimension_semantics=("parallel", "parallel", "parallel")),
    )(x_in, x_in)


# ----------------------------------------------------------------------------
# Surrogate VietorisRips.apply: exact H0 persistence via Prim's MST (plain JAX)
# ----------------------------------------------------------------------------
def _mst_deaths(dist):
    """Dim-0 Vietoris-Rips death times == MST edge weights (Prim)."""
    N = dist.shape[0]
    inf = jnp.float32(jnp.inf)

    def body(i, state):
        in_tree, mind, weights = state
        masked = jnp.where(in_tree, inf, mind)
        j = jnp.argmin(masked)
        w = masked[j]
        in_tree = in_tree.at[j].set(True)
        mind = jnp.minimum(mind, dist[j])
        weights = weights.at[i].set(w)
        return in_tree, mind, weights

    in_tree0 = jnp.zeros((N,), jnp.bool_).at[0].set(True)
    state = (in_tree0, dist[0], jnp.zeros((N - 1,), jnp.float32))
    _, _, weights = jax.lax.fori_loop(0, N - 1, body, state)
    return weights


def vietoris_rips_h0(x):
    # TODO(synk): maxdim=1 (H1) persistence needs boundary-matrix reduction of
    # the Rips complex, which has no clean Pallas/JAX equivalent; only the
    # exact H0 diagram (births=0, deaths=MST edge weights, one essential bar)
    # is produced here.  The sequential O(N^2) Prim loop stays in plain JAX.
    dist = pairwise_dist(x)                     # Pallas hot path
    deaths_fin = jax.vmap(_mst_deaths)(dist)    # (B, N-1)
    B = x.shape[0]
    essential = jnp.full((B, 1), jnp.inf, jnp.float32)
    deaths = jnp.concatenate([deaths_fin, essential], axis=1)   # (B, N)
    births = jnp.zeros_like(deaths)                             # (B, N)
    return births, deaths


# ----------------------------------------------------------------------------
# Kernel 2: Wasserstein-style diagram loss
#   dist = cdist(diagX, diagY, p=inf) ** q
#   p    = matching(dist)                 (surrogate: row-wise argmin)
#   loss = sum_b sum_j ( sum_i cheb(X_i, Y_{p[j]})^q )^(1/q)
# ----------------------------------------------------------------------------
def _pow_int(x, q):
    """x**q via a multiply ladder for small integer q (no EUP pow pass)."""
    qi = int(q)
    if float(qi) == float(q) and 1 <= qi <= 8:
        r = x
        for _ in range(qi - 1):
            r = r * x
        return r
    return x ** q          # rare non-integer q: fall back to pow


def _root(x, q):
    """x**(1/q) without EUP pow for the common cases (applied to (Bt,1,Lp))."""
    if q == 1.0:
        return x
    if q == 2.0:
        return jnp.sqrt(x)
    if q == 4.0:
        return jnp.sqrt(jnp.sqrt(x))
    return x ** (1.0 / q)


def _wasserstein_kernel(x_ref, y_ref, out_ref, *, q, l_valid, l_pad):
    x = x_ref[...]                       # (Bt, Lp, 2)  X points on sublanes
    y = y_ref[...]                       # (Bt, 2, Lp)  Y points on lanes
    bt = x.shape[0]

    xb_c = x[:, :, 0:1]                  # (Bt, Lp, 1)  births of X (columns)
    xd_c = x[:, :, 1:2]                  # (Bt, Lp, 1)  deaths of X
    yb_r = y[:, 0:1, :]                  # (Bt, 1, Lp)  births of Y (rows)
    yd_r = y[:, 1:2, :]                  # (Bt, 1, Lp)  deaths of Y

    # cheb[b, i, j] = Chebyshev(X_i, Y_j) == torch.cdist(diagX, diagY, p=inf)
    cheb = jnp.maximum(jnp.abs(xb_c - yb_r), jnp.abs(xd_c - yd_r))     # (Bt,Lp,Lp)

    jidx = lax.broadcasted_iota(jnp.int32, (bt, l_pad, l_pad), 2)
    if l_pad > l_valid:
        # layout-pad Y columns must never win the matching
        cheb = jnp.where(jidx < l_valid, cheb, jnp.inf)

    # Matching surrogate: row-wise argmin (lowest index on ties).  x**q is
    # monotone on [0, inf), so argmin over cheb == argmin over dist=cheb**q:
    # the dist matrix of the reference is never materialized (one fewer live
    # (Lp, Lp) buffer and no EUP pow pass for the matching).
    # TODO(synk): matching_alg_torch is not defined upstream; this argmin
    # assignment is a surrogate, not an optimal (Hungarian/OT) matching.
    row_min = jnp.min(cheb, axis=2, keepdims=True)                     # (Bt,Lp,1)
    p_idx = jnp.min(jnp.where(cheb == row_min, jidx, l_pad),
                    axis=2, keepdims=True)                             # (Bt,Lp,1)
    onehot = (jidx == p_idx).astype(jnp.float32)                       # (Bt,Lp,Lp)

    # gather(diagY, 1, p) as one (otherwise idle) MXU matmul instead of two
    # XLU lane reductions: matched[b, c, i] = Y_c[p[b, i]]   (lane-major rows)
    matched = jnp.einsum("bcj,bij->bci", y, onehot,
                         preferred_element_type=jnp.float32)           # (Bt,2,Lp)
    mb_r = matched[:, 0:1, :]
    md_r = matched[:, 1:2, :]

    # M[b, a, i] = Chebyshev(X_a, Y_{p[i]}) == cdist(diagX, gathered_Y)[a, i]
    m = jnp.maximum(jnp.abs(xb_c - mb_r), jnp.abs(xd_c - md_r))        # (Bt,Lp,Lp)

    mq = _pow_int(m, q)                                                # VPU only for int q
    if l_pad > l_valid:
        # layout-pad X rows must not contribute to the per-column norm
        aidx = lax.broadcasted_iota(jnp.int32, (bt, l_pad, l_pad), 1)
        mq = jnp.where(aidx < l_valid, mq, 0.0)

    s = jnp.sum(mq, axis=1, keepdims=True)                             # (Bt,1,Lp)
    col = _root(s, q)                    # torch.norm(M, q, dim=1)
    if l_pad > l_valid:
        # layout-pad columns (matchings of padded X rows) excluded from the sum
        col = jnp.where(jidx[:, 0:1, :] < l_valid, col, 0.0)

    out_ref[...] = jnp.sum(col, axis=2)                                # (Bt, 1)


def _pick_batch_tile(b, l_pad, budget_bytes=8 << 20, cap=16):
    """Largest divisor of B whose ~4 live (Lp,Lp) f32 temps fit the budget."""
    per_batch = 4 * l_pad * l_pad * 4
    limit = max(1, min(cap, budget_bytes // per_batch))
    bt = 1
    for c in range(1, b + 1):
        if b % c == 0 and c <= limit:
            bt = c
    return bt


def wasserstein_loss(X, Y, q=2.0, maxdim=1):
    del maxdim  # see TODO in vietoris_rips_h0
    bX, dX = vietoris_rips_h0(X)
    bY, dY = vietoris_rips_h0(Y)

    # torch.stack([b.unsqueeze(-1), d.unsqueeze(-1)], -1).reshape(B, -1, 2)
    diagX = jnp.nan_to_num(jnp.stack([bX, dX], axis=-1), nan=0.0, posinf=0.0)
    diagY = jnp.nan_to_num(jnp.stack([bY, dY], axis=-1), nan=0.0, posinf=0.0)

    # semantic padding to equal lengths (these points DO participate, as in torch)
    lX, lY = diagX.shape[1], diagY.shape[1]
    L = max(lX, lY)
    if lX < L:
        diagX = jnp.pad(diagX, ((0, 0), (0, L - lX), (0, 0)))
    if lY < L:
        diagY = jnp.pad(diagY, ((0, 0), (0, L - lY), (0, 0)))

    B = diagX.shape[0]
    # layout padding to a lane-dense multiple of 128 (masked inside the kernel)
    Lp = ((L + 127) // 128) * 128
    if Lp > L:
        diagX = jnp.pad(diagX, ((0, 0), (0, Lp - L), (0, 0)))
        diagY = jnp.pad(diagY, ((0, 0), (0, Lp - L), (0, 0)))

    diagY_t = jnp.transpose(diagY, (0, 2, 1))        # (B, 2, Lp): Y points on lanes
    q_eff = 1.0 if q == float("inf") else float(q)   # torch uses p=1 when q=inf

    Bt = _pick_batch_tile(B, Lp)                     # amortize per-grid-step overhead
    kern = functools.partial(_wasserstein_kernel, q=q_eff, l_valid=L, l_pad=Lp)

    out = pl.pallas_call(
        kern,
        out_shape=jax.ShapeDtypeStruct((B, 1), jnp.float32),
        grid_spec=pltpu.PrefetchScalarGridSpec(
            num_scalar_prefetch=0,
            grid=(B // Bt,),
            in_specs=[
                pl.BlockSpec((Bt, Lp, 2), lambda g: (g, 0, 0)),   # diagX, sublane-major
                pl.BlockSpec((Bt, 2, Lp), lambda g: (g, 0, 0)),   # diagY, lane-major
            ],
            out_specs=pl.BlockSpec((Bt, 1), lambda g: (g, 0)),    # per-batch partials
        ),
        compiler_params=pltpu.CompilerParams(
            dimension_semantics=("parallel",)),                   # megacore-friendly
    )(diagX.astype(jnp.float32), diagY_t.astype(jnp.float32))
    return jnp.sum(out)


if __name__ == "__main__":
    key = jax.random.PRNGKey(0)
    kx, ky = jax.random.split(key)
    B, N, D = 2, 16, 3                       # point clouds: (batch, points, coords)
    X = jax.random.normal(kx, (B, N, D), dtype=jnp.float32)
    Y = jax.random.normal(ky, (B, N, D), dtype=jnp.float32)

    loss = wasserstein_loss(X, Y, q=2.0, maxdim=1)
    jax.block_until_ready(loss)
    print("KERNEL_OK")
</pallas_src>

<mosaic_0001>
module attributes {stable_mosaic.version = 11 : i64} {
  func.func @_pdist_kernel_vpu(%arg0: i32, %arg1: i32, %arg2: i32, %arg3: memref<1x16x8xf32, #tpu.memory_space<vmem>>, %arg4: memref<1x16x8xf32, #tpu.memory_space<vmem>>, %arg5: memref<1x16x16xf32, #tpu.memory_space<vmem>>) attributes {dimension_semantics = [#tpu.dimension_semantics<parallel>, #tpu.dimension_semantics<parallel>, #tpu.dimension_semantics<parallel>], iteration_bounds = array<i64: 2, 1, 1>, scalar_prefetch = 0 : i64, scratch_operands = 0 : i64, tpu.core_type = #tpu.core_type<tc>, window_params = [{transform_indices = @transform_0, window_bounds = array<i64: 1, 16, 8>}, {transform_indices = @transform_1, window_bounds = array<i64: 1, 16, 8>}, {transform_indices = @transform_2, window_bounds = array<i64: 1, 16, 16>}]} {
    %c0 = arith.constant 0 : index
    %c0_0 = arith.constant 0 : index
    %c0_1 = arith.constant 0 : index
    %0 = vector.load %arg3[%c0, %c0_0, %c0_1] : memref<1x16x8xf32, #tpu.memory_space<vmem>>, vector<1x16x8xf32>
    %1 = vector.shape_cast %0 : vector<1x16x8xf32> to vector<16x8xf32>
    %c0_2 = arith.constant 0 : index
    %c0_3 = arith.constant 0 : index
    %c0_4 = arith.constant 0 : index
    %2 = vector.load %arg4[%c0_2, %c0_3, %c0_4] : memref<1x16x8xf32, #tpu.memory_space<vmem>>, vector<1x16x8xf32>
    %3 = vector.shape_cast %2 : vector<1x16x8xf32> to vector<16x8xf32>
    %4 = tpu.transpose %3, [1, 0] : vector<16x8xf32> -> vector<8x16xf32>
    %cst = arith.constant 0.000000e+00 : f32
    %5 = vector.broadcast %cst : f32 to vector<16x16xf32>
    %6 = vector.extract_strided_slice %1 {offsets = [0, 0], sizes = [16, 1], strides = [1, 1]} : vector<16x8xf32> to vector<16x1xf32>
    %7 = vector.extract_strided_slice %4 {offsets = [0, 0], sizes = [1, 16], strides = [1, 1]} : vector<8x16xf32> to vector<1x16xf32>
    %8 = vector.broadcast %6 : vector<16x1xf32> to vector<16x16xf32>
    %9 = vector.broadcast %7 : vector<1x16xf32> to vector<16x16xf32>
    %10 = arith.subf %8, %9 : vector<16x16xf32>
    %11 = arith.mulf %10, %10 : vector<16x16xf32>
    %12 = arith.addf %5, %11 : vector<16x16xf32>
    %13 = vector.extract_strided_slice %1 {offsets = [0, 1], sizes = [16, 1], strides = [1, 1]} : vector<16x8xf32> to vector<16x1xf32>
    %14 = vector.extract_strided_slice %4 {offsets = [1, 0], sizes = [1, 16], strides = [1, 1]} : vector<8x16xf32> to vector<1x16xf32>
    %15 = vector.broadcast %13 : vector<16x1xf32> to vector<16x16xf32>
    %16 = vector.broadcast %14 : vector<1x16xf32> to vector<16x16xf32>
    %17 = arith.subf %15, %16 : vector<16x16xf32>
    %18 = arith.mulf %17, %17 : vector<16x16xf32>
    %19 = arith.addf %12, %18 : vector<16x16xf32>
    %20 = vector.extract_strided_slice %1 {offsets = [0, 2], sizes = [16, 1], strides = [1, 1]} : vector<16x8xf32> to vector<16x1xf32>
    %21 = vector.extract_strided_slice %4 {offsets = [2, 0], sizes = [1, 16], strides = [1, 1]} : vector<8x16xf32> to vector<1x16xf32>
    %22 = vector.broadcast %20 : vector<16x1xf32> to vector<16x16xf32>
    %23 = vector.broadcast %21 : vector<1x16xf32> to vector<16x16xf32>
    %24 = arith.subf %22, %23 : vector<16x16xf32>
    %25 = arith.mulf %24, %24 : vector<16x16xf32>
    %26 = arith.addf %19, %25 : vector<16x16xf32>
    %27 = math.sqrt %26 : vector<16x16xf32>
    %c0_5 = arith.constant 0 : index
    %c0_6 = arith.constant 0 : index
    %c0_7 = arith.constant 0 : index
    %28 = vector.load %arg5[%c0_5, %c0_6, %c0_7] : memref<1x16x16xf32, #tpu.memory_space<vmem>>, vector<1x16x16xf32>
    %29 = vector.shape_cast %28 : vector<1x16x16xf32> to vector<16x16xf32>
    %30 = vector.shape_cast %27 : vector<16x16xf32> to vector<1x16x16xf32>
    tpu.vector_store %arg5[%c0_5, %c0_6, %c0_7], %30 {strides = array<i32>} : memref<1x16x16xf32, #tpu.memory_space<vmem>>, vector<1x16x16xf32>,
    return
  }
  func.func @transform_0(%arg0: i32, %arg1: i32, %arg2: i32) -> (i32, i32, i32) {
    %c0_i32 = arith.constant 0 : i32
    %c0_i32_0 = arith.constant 0 : i32
    return %arg0, %arg1, %c0_i32 : i32, i32, i32
  }
  func.func @transform_1(%arg0: i32, %arg1: i32, %arg2: i32) -> (i32, i32, i32) {
    %c0_i32 = arith.constant 0 : i32
    %c0_i32_0 = arith.constant 0 : i32
    return %arg0, %arg2, %c0_i32 : i32, i32, i32
  }
  func.func @transform_2(%arg0: i32, %arg1: i32, %arg2: i32) -> (i32, i32, i32) {
    %c0_i32 = arith.constant 0 : i32
    return %arg0, %arg1, %arg2 : i32, i32, i32
  }
}

</mosaic_0001>

<llo_original>
// kernel: tpu_custom_call.1
$region0: #{tpu_custom_call.1}
  #allocation0 [shape = 'u32[]', space=smem, size = 0x4, offset = 0x4, fixed_abs, tag = 'smem constant byte address 0x4 - core index']
  #allocation1 [shape = 'u32[72,128]{1,0:T(1,128)}', space=vmem, size = 0x9000, scoped, tag = 'internal scratch']
  %s0 = inlined_call_operand.vmem [shape: f32[2,16,8], index: 0, kind: input, shape index: {}]
  %s1 = inlined_call_operand.vmem [shape: f32[2,16,8], index: 1, kind: input, shape index: {}]
  %s2 = inlined_call_operand.hbm [shape: f32[2,16,16], index: 2, kind: output, shape index: {}]
  %s3 = sld [smem:[#allocation0]]
  $region41: #{tpu_custom_call.1} parent=0
    _
  %s5 = ssub.s32 1, %s3
  %s6 = scalar_select 0, %s5, %s3
  $region1: #{tpu_custom_call.1} parent=0
    #allocation2 [shape = 'u8[16384]{0}', space=vmem, size = 0x4000, scoped, tag = 'output window, operand 0']
    #allocation3 [shape = 's32[2]{0}', space=sflag, size = 0x8, scoped, tag = 'scoped memory for tpu_custom_call.1']
    %7 = vsyncpa [#allocation3], 0
    %s8 = scalar_lea.sflag [#allocation3], 1
    %9 = vsyncpa %s8, 0
    loop: start=0, step=1, limit=4
    $region2: #{tpu_custom_call.1} parent=1 // loop_pre_header
      _
    $region3: #{tpu_custom_call.1} parent=1 // loop_header
      %s11 = sphi 0, %s15
      %p12 = scmp.ge.s32.totalorder %s11, 4
      %s18 = sphi 0, %s37
      %s19 = sphi 0, %s33
      %s20 = sphi 0, %s29
      %s21 = sphi 0, %s18
      %s22 = sphi 0, %s19
      %s23 = sphi 0, %s20
      %s24 = sphi 0, %s21
      %s25 = sphi 0, %s22
      %s26 = sphi 0, %s23
      %s42 = sphi 0, %s44
      %s45 = sphi 0, %s42
      %s46 = sphi 0, %s45
      %s62 = sphi 0, %s46
      %s70 = sphi 0, %s72
      %s73 = sphi 0, %s70
      %s74 = sphi 0, %s73
      %s90 = sphi 0, %s74
      %s100 = sphi 0, %s102
      %s103 = sphi 0, %s100
      %s104 = sphi 0, %s103
      %s120 = sphi 0, %s104
    $region4: #{tpu_custom_call.1} parent=1 // loop_header_branch
      %14 = sbr.rel (%p12) target = $region8
    $region5: #{tpu_custom_call.1} parent=1 // loop_body
      %s16 = ssub.s32 %s11, 1
      %s17 = ssub.s32 %s11, 2
      %s27 = sadd.s32 1, %s20
      %p28 = scmp.ge.s32.totalorder %s27, 1
      %s29 = scalar_select %p28, 0, %s27
      %s30 = sadd.s32 1, %s19
      %s31 = scalar_select %p28, %s30, %s19
      %p32 = scmp.ge.s32.totalorder %s31, 1
      %s33 = scalar_select %p32, 0, %s31
      %s34 = sadd.s32 1, %s18
      %s35 = scalar_select %p32, %s34, %s18
      %p36 = scmp.ge.s32.totalorder %s35, 2
      %s37 = scalar_select %p36, 0, %s35
      %s38 = ssub.s32 %s18, %s37
      %s39 = ssub.s32 %s19, %s33
      %s40 = sor.u32 %s38, %s39
      %p41 = scmp.eq.s32.totalorder %s40, 0
      %s43 = sadd.s32 %s42, 1
      %s44 = scalar_select %p41, %s42, %s43
      %p47 = pneg %p41
      %p48 = scmp.eq.s32.totalorder %s11, 1
      %p49 = por %p47, %p48
      %p50 = scmp.ne.s32.totalorder %s42, %s45
      %p51 = scmp.eq.s32.totalorder %s11, 0
      %p52 = por %p50, %p51
      %p53 = scmp.ne.s32.totalorder %s42, %s45
      %p54 = scmp.eq.s32.totalorder %s16, 1
      %p55 = por %p53, %p54
      %p56 = scmp.ne.s32.totalorder %s45, %s46
      %p57 = scmp.eq.s32.totalorder %s16, 0
      %p58 = por %p56, %p57
      %p59 = scmp.ne.s32.totalorder %s45, %s46
      %p60 = scmp.eq.s32.totalorder %s17, 1
      %p61 = por %p59, %p60
      %p63 = scmp.ne.s32.totalorder %s46, %s62
      %p64 = scmp.eq.s32.totalorder %s17, 0
      %p65 = por %p63, %p64
      %s66 = ssub.s32 %s18, %s37
      %s67 = ssub.s32 %s20, %s29
      %s68 = sor.u32 %s66, %s67
      %p69 = scmp.eq.s32.totalorder %s68, 0
      %s71 = sadd.s32 %s70, 1
      %s72 = scalar_select %p69, %s70, %s71
      %p75 = pneg %p69
      %p76 = scmp.eq.s32.totalorder %s11, 1
      %p77 = por %p75, %p76
      %p78 = scmp.ne.s32.totalorder %s70, %s73
      %p79 = scmp.eq.s32.totalorder %s11, 0
      %p80 = por %p78, %p79
      %p81 = scmp.ne.s32.totalorder %s70, %s73
      %p82 = scmp.eq.s32.totalorder %s16, 1
      %p83 = por %p81, %p82
      %p84 = scmp.ne.s32.totalorder %s73, %s74
      %p85 = scmp.eq.s32.totalorder %s16, 0
      %p86 = por %p84, %p85
      %p87 = scmp.ne.s32.totalorder %s73, %s74
      %p88 = scmp.eq.s32.totalorder %s17, 1
      %p89 = por %p87, %p88
      %p91 = scmp.ne.s32.totalorder %s74, %s90
      %p92 = scmp.eq.s32.totalorder %s17, 0
      %p93 = por %p91, %p92
      %s94 = ssub.s32 %s18, %s37
      %s95 = ssub.s32 %s19, %s33
      %s96 = sor.u32 %s94, %s95
      %s97 = ssub.s32 %s20, %s29
      %s98 = sor.u32 %s96, %s97
      %p99 = scmp.eq.s32.totalorder %s98, 0
      %s101 = sadd.s32 %s100, 1
      %s102 = scalar_select %p99, %s100, %s101
      %p105 = pneg %p99
      %p106 = scmp.eq.s32.totalorder %s11, 1
      %p107 = por %p105, %p106
      %p108 = scmp.ne.s32.totalorder %s100, %s103
      %p109 = scmp.eq.s32.totalorder %s11, 0
      %p110 = por %p108, %p109
      %p111 = scmp.ne.s32.totalorder %s100, %s103
      %p112 = scmp.eq.s32.totalorder %s16, 1
      %p113 = por %p111, %p112
      %p114 = scmp.ne.s32.totalorder %s103, %s104
      %p115 = scmp.eq.s32.totalorder %s16, 0
      %p116 = por %p114, %p115
      %p117 = scmp.ne.s32.totalorder %s103, %s104
      %p118 = scmp.eq.s32.totalorder %s17, 1
      %p119 = por %p117, %p118
      %p121 = scmp.ne.s32.totalorder %s104, %s120
      %p122 = scmp.eq.s32.totalorder %s17, 0
      %p123 = por %p121, %p122
      %p124 = scmp.le.s32.totalorder 1, %s11
      %p125 = scmp.lt.s32.totalorder %s11, 3
      %p126 = pnand %p124, %p125
      %p127 = pneg %p126
      // Predicated region
      $region9: #{tpu_custom_call.1} parent=5 // pred_check
        _
      $region10: #{tpu_custom_call.1} parent=5 // pred_check_branch
        %129 = sbr.rel (%p126) target = $region12
      $region11: #{tpu_custom_call.1} parent=5 // pred_region
        %s130 = ssub.s32 %s11, 1
      $region12: #{tpu_custom_call.1} parent=5 // pred_fallthru
        _
      %p131 = scmp.lt.s32.totalorder %s11, 2
      // Predicated region
      $region13: #{tpu_custom_call.1} parent=5 // pred_check
        %p132 = pneg %p131
      $region14: #{tpu_custom_call.1} parent=5 // pred_check_branch
        %134 = sbr.rel (%p132) target = $region16
      $region15: #{tpu_custom_call.1} parent=5 // pred_region
        // Predicated region
        $region17: #{tpu_custom_call.1} parent=15 // pred_check
          %p135 = pneg %p52
        $region18: #{tpu_custom_call.1} parent=15 // pred_check_branch
          %137 = sbr.rel (%p135) target = $region20
        $region19: #{tpu_custom_call.1} parent=15 // pred_region
          %s138 = smul.u32 2, %s19
          %p139 = scmp.lt.s32.totalorder %s18, 1
          %s140 = scalar_select %p139, %s18, 1
          %p141 = scmp.lt.s32.totalorder %s138, 1
          %s142 = scalar_select %p141, %s138, 1
          %s143 = smul.addr %s140, 2
          %s144 = sadd.s32 %s142, %s143
          %s145 = smul.addr %s144, 8
          %s146 = scalar_lea.vmem %s0, %s145
          %s147 = smul.u32 2, %s19
        $region20: #{tpu_custom_call.1} parent=15 // pred_fallthru
          _
        // Predicated region
        $region21: #{tpu_custom_call.1} parent=15 // pred_check
          %p148 = pneg %p80
        $region22: #{tpu_custom_call.1} parent=15 // pred_check_branch
          %150 = sbr.rel (%p148) target = $region24
        $region23: #{tpu_custom_call.1} parent=15 // pred_region
          %s151 = smul.u32 2, %s20
          %p152 = scmp.lt.s32.totalorder %s18, 1
          %s153 = scalar_select %p152, %s18, 1
          %p154 = scmp.lt.s32.totalorder %s151, 1
          %s155 = scalar_select %p154, %s151, 1
          %s156 = smul.addr %s153, 2
          %s157 = sadd.s32 %s155, %s156
          %s158 = smul.addr %s157, 8
          %s159 = scalar_lea.vmem %s1, %s158
          %s160 = smul.u32 2, %s20
        $region24: #{tpu_custom_call.1} parent=15 // pred_fallthru
          _
      $region16: #{tpu_custom_call.1} parent=5 // pred_fallthru
        _
      %p161 = scmp.le.s32.totalorder 1, %s11
      %p162 = scmp.lt.s32.totalorder %s11, 3
      %p163 = pnand %p161, %p162
      %p164 = pneg %p163
      // Predicated region
      $region25: #{tpu_custom_call.1} parent=5 // pred_check
        _
      $region26: #{tpu_custom_call.1} parent=5 // pred_check_branch
        %166 = sbr.rel (%p163) target = $region28
      $region27: #{tpu_custom_call.1} parent=5 // pred_region
        %s167 = ssub.s32 %s11, 1
        %s168 = smul.u32 2, %s22
        %p169 = scmp.lt.s32.totalorder %s21, 1
        %s170 = scalar_select %p169, %s21, 1
        %p171 = scmp.lt.s32.totalorder %s168, 1
        %s172 = scalar_select %p171, %s168, 1
        %s173 = smul.addr %s170, 2
        %s174 = sadd.s32 %s172, %s173
        %s175 = smul.addr %s174, 8
        %s176 = scalar_lea.vmem %s0, %s175
        %p177 = pneg %p58
        %p178 = pneg %p55
        %s179 = smul.u32 2, %s23
        %p180 = scmp.lt.s32.totalorder %s21, 1
        %s181 = scalar_select %p180, %s21, 1
        %p182 = scmp.lt.s32.totalorder %s179, 1
        %s183 = scalar_select %p182, %s179, 1
        %s184 = smul.addr %s181, 2
        %s185 = sadd.s32 %s183, %s184
        %s186 = smul.addr %s185, 8
        %s187 = scalar_lea.vmem %s1, %s186
        %p188 = pneg %p86
        %p189 = pneg %p83
        %p190 = pneg %p116
        %p191 = pneg %p113
        %s192 = sand.u32 %s103, 1
        %s193 = scalar_lea.sflag [#allocation3], %s192
        %s194 = sand.u32 %s103, 1
        %s195 = smul.addr %s194, 16
        %s196 = scalar_lea.vmem [#allocation2], %s195
        %s197 = smul.u32 2, %s22
        %p198 = scmp.lt.s32.totalorder %s21, 1
        %s199 = scalar_select %p198, %s21, 1
        %p200 = scmp.lt.s32.totalorder %s197, 1
        %s201 = scalar_select %p200, %s197, 1
        %s202 = smul.addr %s199, 2
        %s203 = sadd.s32 %s201, %s202
        %s204 = smul.addr %s203, 8
        %s205 = scalar_lea.vmem %s0, %s204
        %s206 = smul.u32 2, %s22
        %s207 = smul.u32 2, %s23
        %p208 = scmp.lt.s32.totalorder %s21, 1
        %s209 = scalar_select %p208, %s21, 1
        %p210 = scmp.lt.s32.totalorder %s207, 1
        %s211 = scalar_select %p210, %s207, 1
        %s212 = smul.addr %s209, 2
        %s213 = sadd.s32 %s211, %s212
        %s214 = smul.addr %s213, 8
        %s215 = scalar_lea.vmem %s1, %s214
        %s216 = smul.u32 2, %s23
        %s217 = smul.u32 2, %s22
        %v218 = vld [vmem:[%s205] sm:$0xff]
        %v219 = vld [vmem:[%s205 + $0x8] sm:$0xff]
        %v220 = vld [vmem:[%s215] sm:$0xff]
        %v221 = vld [vmem:[%s215 + $0x8] sm:$0xff]
        %222 = vxpose.xlu0.b32.start [1/16] %v220, 128
        %223 = vxpose.xlu0.b32.cont [2/16] %v221, 128
        %224 = vxpose.xlu0.b32.cont [3/16] 0.0, 128
        %225 = vxpose.xlu0.b32.cont [4/16] 0.0, 128
        %226 = vxpose.xlu0.b32.cont [5/16] 0.0, 128
        %227 = vxpose.xlu0.b32.cont [6/16] 0.0, 128
        %228 = vxpose.xlu0.b32.cont [7/16] 0.0, 128
        %229 = vxpose.xlu0.b32.cont [8/16] 0.0, 128
        %230 = vxpose.xlu0.b32.cont [9/16] 0.0, 128
        %231 = vxpose.xlu0.b32.cont [10/16] 0.0, 128
        %232 = vxpose.xlu0.b32.cont [11/16] 0.0, 128
        %233 = vxpose.xlu0.b32.cont [12/16] 0.0, 128
        %234 = vxpose.xlu0.b32.cont [13/16] 0.0, 128
        %235 = vxpose.xlu0.b32.cont [14/16] 0.0, 128
        %236 = vxpose.xlu0.b32.cont [15/16] 0.0, 128
        %237 = vxpose.xlu0.b32.end [16/16] 0.0, 128
        %v238 = vpop.trf.xlu0
        %v239 = vpop.trf.xlu0
        %v240 = vpop.trf.xlu0
        %v241 = vpop.trf.xlu0
        %v242 = vpop.trf.xlu0
        %v243 = vpop.trf.xlu0
        %v244 = vpop.trf.xlu0
        %v245 = vpop.trf.xlu0
        %v246 = vpop.trf.xlu0
        %v247 = vpop.trf.xlu0
        %v248 = vpop.trf.xlu0
        %v249 = vpop.trf.xlu0
        %v250 = vpop.trf.xlu0
        %v251 = vpop.trf.xlu0
        %v252 = vpop.trf.xlu0
        %v253 = vpop.trf.xlu0
        %255 = vset.pattern.permute.xlu0 0
        %256 = vperm.xlu0 %255, %v218
        %v257 = vpop.permute.xlu0 %256
        %260 = vset.pattern.permute.xlu0 0
        %261 = vperm.xlu0 %260, %v219
        %v262 = vpop.permute.xlu0 %261
        %v264 = vperm.slane %v238, 0
        %v265 = vsub.f32 %v257, %v264
        %v266 = vsub.f32 %v262, %v264
        %v267 = vmul.f32 %v265, %v265
        %v268 = vmul.f32 %v266, %v266
        %v269 = vadd.f32 %v267, 0.0
        %v270 = vadd.f32 %v268, 0.0
        %271 = vset.pattern.permute.xlu0 1
        %272 = vperm.xlu0 %271, %v218
        %v273 = vpop.permute.xlu0 %272
        %275 = vset.pattern.permute.xlu0 1
        %276 = vperm.xlu0 %275, %v219
        %v277 = vpop.permute.xlu0 %276
        %v279 = vperm.slane %v238, 1
        %v280 = vsub.f32 %v273, %v279
        %v281 = vsub.f32 %v277, %v279
        %v282 = vmul.f32 %v280, %v280
        %v283 = vmul.f32 %v281, %v281
        %v284 = vadd.f32 %v269, %v282
        %v285 = vadd.f32 %v270, %v283
        %286 = vset.pattern.permute.xlu0 2
        %287 = vperm.xlu0 %286, %v218
        %v288 = vpop.permute.xlu0 %287
        %290 = vset.pattern.permute.xlu0 2
        %291 = vperm.xlu0 %290, %v219
        %v292 = vpop.permute.xlu0 %291
        %v294 = vperm.slane %v238, 2
        %v295 = vsub.f32 %v288, %v294
        %v296 = vsub.f32 %v292, %v294
        %v297 = vmul.f32 %v295, %v295
        %v298 = vmul.f32 %v296, %v296
        %v299 = vadd.f32 %v284, %v297
        %v300 = vadd.f32 %v285, %v298
        %v301 = vrsqrt.pop %v299
        %v302 = vmul.f32 %v301, %v299
        %v303 = vmul.f32 %v302, %v301
        %v304 = vmul.f32 0.5, %v303
        %v305 = vsub.f32 1.5, %v304
        %v306 = vmul.f32 %v301, %v305
        %v307 = vmul.f32 %v299, %v306
        %vm308 = vcmp.eq.f32.partialorder %v299, inf
        %v309 = vsel %vm308, %v299, %v307
        %vm310 = vcmp.eq.f32.partialorder %v299, 0.0
        %v311 = vand.u32 %v299, 2147483648
        %v312 = vsel %vm310, %v311, %v309
        %v313 = vrsqrt.pop %v300
        %v314 = vmul.f32 %v313, %v300
        %v315 = vmul.f32 %v314, %v313
        %v316 = vmul.f32 0.5, %v315
        %v317 = vsub.f32 1.5, %v316
        %v318 = vmul.f32 %v313, %v317
        %v319 = vmul.f32 %v300, %v318
        %vm320 = vcmp.eq.f32.partialorder %v300, inf
        %v321 = vsel %vm320, %v300, %v319
        %vm322 = vcmp.eq.f32.partialorder %v300, 0.0
        %v323 = vand.u32 %v300, 2147483648
        %v324 = vsel %vm322, %v323, %v321
        %vm325 = vcmask 130048
        %326 = vst.msk [vmem:[%s196] sm:$0xff] %vm325, %v312
        %327 = vst.msk [vmem:[%s196 + $0x8] sm:$0xff] %vm325, %v324
        %s328 = sand.u32 %s103, 1
        %s329 = scalar_lea.sflag [#allocation3], %s328
        %s330 = sand.u32 %s103, 1
        %s331 = smul.addr %s330, 16
        %s332 = scalar_lea.vmem [#allocation2], %s331
        // Predicated region
        $region29: #{tpu_custom_call.1} parent=27 // pred_check
          %p333 = pneg %p113
        $region30: #{tpu_custom_call.1} parent=27 // pred_check_branch
          %335 = sbr.rel (%p333) target = $region32
        $region31: #{tpu_custom_call.1} parent=27 // pred_region
          %s336 = smul.u32 2, %s22
          %338 = vsyncadd %s329, 0
          %s339 = sadd.s32 %s23, %s336
          %s340 = smul.addr %s21, 2
          %s341 = sadd.s32 %s339, %s340
          %s342 = smul.addr %s341, 8
          %s343 = scalar_lea.hbm %s2, %s342
          %s344 = sshll.u32 %s332, 4
          %s345 = int_to_ptr.vmem [resolvable:$true] %s344
          %s346 = sshll.u32 %s343, 4
          %s347 = int_to_ptr.hbm [resolvable:$true] %s346
          %352 = dma.vmem_to_hbm [thread:$0]  %s345, 256, %s347, %s329, 128, 128, 8
        $region32: #{tpu_custom_call.1} parent=27 // pred_fallthru
          _
      $region28: #{tpu_custom_call.1} parent=5 // pred_fallthru
        _
      %p353 = scmp.le.s32.totalorder 2, %s11
      // Predicated region
      $region33: #{tpu_custom_call.1} parent=5 // pred_check
        %p354 = pneg %p353
      $region34: #{tpu_custom_call.1} parent=5 // pred_check_branch
        %356 = sbr.rel (%p354) target = $region36
      $region35: #{tpu_custom_call.1} parent=5 // pred_region
        %s357 = ssub.s32 %s11, 2
        // Predicated region
        $region37: #{tpu_custom_call.1} parent=35 // pred_check
          %p358 = pneg %p119
        $region38: #{tpu_custom_call.1} parent=35 // pred_check_branch
          %360 = sbr.rel (%p358) target = $region40
        $region39: #{tpu_custom_call.1} parent=35 // pred_region
          %s361 = sand.u32 %s104, 1
          %s362 = scalar_lea.sflag [#allocation3], %s361
          %s363 = sand.u32 %s104, 1
          %s364 = smul.addr %s363, 16
          %s365 = scalar_lea.vmem [#allocation2], %s364
          %367 = dma.done %s362, 256
        $region40: #{tpu_custom_call.1} parent=35 // pred_fallthru
          _
      $region36: #{tpu_custom_call.1} parent=5 // pred_fallthru
        _
    $region6: #{tpu_custom_call.1} parent=1 // loop_footer
      %s15 = sadd.s32 1, %s11
    $region7: #{tpu_custom_call.1} parent=1 // loop_footer_branch
      %10 = sbr.rel target = $region3
    $region8: #{tpu_custom_call.1} parent=1 // loop_exit
      _
    %368 = vsyncpa [#allocation3], 1
    %s369 = scalar_lea.sflag [#allocation3], 1
    %370 = vsyncpa %s369, 1

</llo_original>
